<compile_context>
chip_gen: v7x
topology: tpu7x:2x2x1
jax: 0.10.0
libtpu: 0.0.40
codegen_flags: <defaults>
</compile_context>

<pallas_src>
import jax
import jax.numpy as jnp
from jax.experimental import pallas as pl
from jax.experimental.pallas import tpu as pltpu

# Layer dims of MLPModel_A_Ni: 6 -> 24 -> 18 -> 12 -> 1
_DIMS = [(6, 24), (24, 18), (18, 12), (12, 1)]


def _round_up(n, m):
    return ((n + m - 1) // m) * m


def _cdiv(a, b):
    return (a + b - 1) // b


def _sigmoid(h):
    # tanh form: one EUP op + ~2 VPU ops per value; matches XLA's logistic expansion.
    return 0.5 * jnp.tanh(0.5 * h) + 0.5


def mlp_kernel(x_ref, wb1_ref, wb2_ref, wb3_ref, wb4_ref, o_ref):
    """One batch tile.  x_ref: (6, TB); wbN_ref: (out_f, in_f + 1); o_ref: (1, TB)."""

    def linear(h, wb_ref, fin):
        wb = wb_ref[...]
        w, b = wb[:, :fin], wb[:, fin:fin + 1]           # (out, in), (out, 1)
        return jnp.dot(w, h, preferred_element_type=jnp.float32) + b

    h = x_ref[...]                                       # (6, TB) f32, batch on lanes
    h = _sigmoid(linear(h, wb1_ref, 6))                  # (24, TB)
    h = _sigmoid(linear(h, wb2_ref, 24))                 # (18, TB)
    h = jnp.maximum(linear(h, wb3_ref, 18), 0.0)         # (12, TB)
    o_ref[...] = linear(h, wb4_ref, 12)                  # (1, TB) lane-dense store


def _vmem_capacity_bytes():
    """Physical VMEM of this chip generation; conservative fallback = v7x 64 MiB."""
    try:
        cap = getattr(pltpu.get_tpu_info(), "vmem_capacity_bytes", None)
        if cap:
            return int(cap)
    except Exception:
        pass
    return 64 << 20


def _tile_plan(B, vmem_cap_bytes):
    """Pick (n_steps, tile_b).

    Peak VMEM per batch lane is ~600 B (double-buffered x tile + h1/h2/h3 f32
    intermediates + double-buffered output + compiler temporaries), so the tile
    cap is derived from the chip's VMEM: ~60K lanes on v7x (64 MiB), ~120K on
    v5e/v6e (128 MiB).  tb is then derived from B so tail padding stays < n*128.
    """
    per_lane_bytes = 640
    cap = (int(0.6 * vmem_cap_bytes) // per_lane_bytes) // 128 * 128
    cap = max(128, min(cap, 131072))        # beyond ~128K lanes the step overhead is <1%
    n = _cdiv(B, cap)
    if B >= 16384:
        n = max(n, 2)                        # keep grid >= 2: v7x megacore + pipelining
    tb = _round_up(_cdiv(B, n), 128)
    return n, tb


def mlp_forward(x, params):
    """x: (B, 6) f32.  params: PyTorch-layout weights wN (out,in) and biases bN (out,)."""
    B, F = x.shape
    assert F == _DIMS[0][0]

    # Pack each bias as an extra weight column: (out_f, in_f + 1).
    wbs = [jnp.concatenate([params[f"w{i}"], params[f"b{i}"][:, None]], axis=1)
           for i in range(1, 5)]

    vmem_cap = _vmem_capacity_bytes()
    n, tb = _tile_plan(B, vmem_cap)
    bp = n * tb

    # Single transpose(+tiny pad) pass: (B, 6) -> (6, Bp), batch on the lane axis.
    xt = jnp.pad(x.T, ((0, 0), (0, bp - B)))

    flops = 2 * bp * sum(fi * fo for fi, fo in _DIMS)
    bytes_accessed = 4 * (xt.size + bp + sum(int(wb.size) for wb in wbs))

    out_t = pl.pallas_call(
        mlp_kernel,
        out_shape=jax.ShapeDtypeStruct((1, bp), jnp.float32),
        grid=(n,),
        in_specs=[pl.BlockSpec((F, tb), lambda i: (0, i))] +
                 [pl.BlockSpec(wb.shape, lambda i: (0, 0)) for wb in wbs],
        out_specs=pl.BlockSpec((1, tb), lambda i: (0, i)),
        compiler_params=pltpu.CompilerParams(
            dimension_semantics=("parallel",),
            # Large tiles exceed the scoped defaults (16/32 MiB); request ~85% of
            # physical VMEM (<= ~54 MiB on v7x, <= ~109 MiB on v5e/v6e).
            vmem_limit_bytes=min(int(0.85 * vmem_cap), 112 << 20)),
        cost_estimate=pl.CostEstimate(
            flops=flops,
            transcendentals=bp * (_DIMS[0][1] + _DIMS[1][1]),
            bytes_accessed=bytes_accessed),
    )(xt, *wbs)

    return out_t[:, :B].T                                 # back to (B, 1)


def init_params(key):
    """Deterministic init mimicking nn.Linear default (U(+/- 1/sqrt(fan_in)))."""
    params = {}
    for i, (fin, fout) in enumerate(_DIMS, start=1):
        key, kw, kb = jax.random.split(key, 3)
        bound = 1.0 / (fin ** 0.5)
        # PyTorch layout: weight (out_f, in_f), bias (out_f,)
        params[f"w{i}"] = jax.random.uniform(kw, (fout, fin), jnp.float32, -bound, bound)
        params[f"b{i}"] = jax.random.uniform(kb, (fout,), jnp.float32, -bound, bound)
    return params


def mlp_reference(x, params):
    h = jax.nn.sigmoid(x @ params["w1"].T + params["b1"])
    h = jax.nn.sigmoid(h @ params["w2"].T + params["b2"])
    h = jnp.maximum(h @ params["w3"].T + params["b3"], 0.0)
    return h @ params["w4"].T + params["b4"]


if __name__ == "__main__":
    key = jax.random.PRNGKey(0)
    key, kx = jax.random.split(key)
    B = 8
    x = jax.random.normal(kx, (B, 6), jnp.float32)         # (batch=8, features=6)
    params = init_params(key)

    fwd = jax.jit(mlp_forward)
    out = jax.block_until_ready(fwd(x, params))
    ref = mlp_reference(x, params)

    assert out.shape == (B, 1), out.shape
    err = float(jnp.max(jnp.abs(out - ref)))
    assert jnp.allclose(out, ref, atol=1e-4, rtol=1e-4), f"mismatch vs reference: {err}"
    print("KERNEL_OK")
</pallas_src>

<mosaic_0001>
module attributes {stable_mosaic.version = 11 : i64} {
  func.func @mlp_kernel(%arg0: i32, %arg1: memref<6x128xf32, #tpu.memory_space<vmem>>, %arg2: memref<24x7xf32, #tpu.memory_space<vmem>>, %arg3: memref<18x25xf32, #tpu.memory_space<vmem>>, %arg4: memref<12x19xf32, #tpu.memory_space<vmem>>, %arg5: memref<1x13xf32, #tpu.memory_space<vmem>>, %arg6: memref<1x128xf32, #tpu.memory_space<vmem>>) attributes {dimension_semantics = [#tpu.dimension_semantics<parallel>], iteration_bounds = array<i64: 1>, scalar_prefetch = 0 : i64, scratch_operands = 0 : i64, tpu.core_type = #tpu.core_type<tc>, window_params = [{transform_indices = @transform_0, window_bounds = array<i64: 6, 128>}, {pipeline_mode = #tpu.pipeline_mode<synchronous>, transform_indices = @transform_1, window_bounds = array<i64: 24, 7>}, {pipeline_mode = #tpu.pipeline_mode<synchronous>, transform_indices = @transform_2, window_bounds = array<i64: 18, 25>}, {pipeline_mode = #tpu.pipeline_mode<synchronous>, transform_indices = @transform_3, window_bounds = array<i64: 12, 19>}, {pipeline_mode = #tpu.pipeline_mode<synchronous>, transform_indices = @transform_4, window_bounds = array<i64: 1, 13>}, {transform_indices = @transform_5, window_bounds = array<i64: 1, 128>}]} {
    %c0 = arith.constant 0 : index
    %c0_0 = arith.constant 0 : index
    %0 = vector.load %arg1[%c0, %c0_0] : memref<6x128xf32, #tpu.memory_space<vmem>>, vector<6x128xf32>
    %c0_1 = arith.constant 0 : index
    %c0_2 = arith.constant 0 : index
    %1 = vector.load %arg2[%c0_1, %c0_2] : memref<24x7xf32, #tpu.memory_space<vmem>>, vector<24x7xf32>
    %2 = vector.extract_strided_slice %1 {offsets = [0, 0], sizes = [24, 6], strides = [1, 1]} : vector<24x7xf32> to vector<24x6xf32>
    %3 = vector.extract_strided_slice %1 {offsets = [0, 6], sizes = [24, 1], strides = [1, 1]} : vector<24x7xf32> to vector<24x1xf32>
    %cst = arith.constant dense<0.000000e+00> : vector<24x128xf32>
    %4 = tpu.matmul %2, %0, %cst {dimension_numbers = #tpu.dot_dimension_numbers<[1], [0], [0], [1], [0, 0, 1, 1], [], []>} : vector<24x6xf32>, vector<6x128xf32>, vector<24x128xf32> -> vector<24x128xf32>
    %5 = vector.broadcast %3 : vector<24x1xf32> to vector<24x128xf32>
    %6 = arith.addf %4, %5 : vector<24x128xf32>
    %cst_3 = arith.constant 5.000000e-01 : f32
    %7 = vector.broadcast %cst_3 : f32 to vector<24x128xf32>
    %8 = arith.mulf %7, %6 : vector<24x128xf32>
    %9 = math.tanh %8 : vector<24x128xf32>
    %cst_4 = arith.constant 5.000000e-01 : f32
    %10 = vector.broadcast %cst_4 : f32 to vector<24x128xf32>
    %11 = arith.mulf %10, %9 : vector<24x128xf32>
    %cst_5 = arith.constant 5.000000e-01 : f32
    %12 = vector.broadcast %cst_5 : f32 to vector<24x128xf32>
    %13 = arith.addf %11, %12 : vector<24x128xf32>
    %c0_6 = arith.constant 0 : index
    %c0_7 = arith.constant 0 : index
    %14 = vector.load %arg3[%c0_6, %c0_7] : memref<18x25xf32, #tpu.memory_space<vmem>>, vector<18x25xf32>
    %15 = vector.extract_strided_slice %14 {offsets = [0, 0], sizes = [18, 24], strides = [1, 1]} : vector<18x25xf32> to vector<18x24xf32>
    %16 = vector.extract_strided_slice %14 {offsets = [0, 24], sizes = [18, 1], strides = [1, 1]} : vector<18x25xf32> to vector<18x1xf32>
    %cst_8 = arith.constant dense<0.000000e+00> : vector<18x128xf32>
    %17 = tpu.matmul %15, %13, %cst_8 {dimension_numbers = #tpu.dot_dimension_numbers<[1], [0], [0], [1], [0, 0, 1, 1], [], []>} : vector<18x24xf32>, vector<24x128xf32>, vector<18x128xf32> -> vector<18x128xf32>
    %18 = vector.broadcast %16 : vector<18x1xf32> to vector<18x128xf32>
    %19 = arith.addf %17, %18 : vector<18x128xf32>
    %cst_9 = arith.constant 5.000000e-01 : f32
    %20 = vector.broadcast %cst_9 : f32 to vector<18x128xf32>
    %21 = arith.mulf %20, %19 : vector<18x128xf32>
    %22 = math.tanh %21 : vector<18x128xf32>
    %cst_10 = arith.constant 5.000000e-01 : f32
    %23 = vector.broadcast %cst_10 : f32 to vector<18x128xf32>
    %24 = arith.mulf %23, %22 : vector<18x128xf32>
    %cst_11 = arith.constant 5.000000e-01 : f32
    %25 = vector.broadcast %cst_11 : f32 to vector<18x128xf32>
    %26 = arith.addf %24, %25 : vector<18x128xf32>
    %c0_12 = arith.constant 0 : index
    %c0_13 = arith.constant 0 : index
    %27 = vector.load %arg4[%c0_12, %c0_13] : memref<12x19xf32, #tpu.memory_space<vmem>>, vector<12x19xf32>
    %28 = vector.extract_strided_slice %27 {offsets = [0, 0], sizes = [12, 18], strides = [1, 1]} : vector<12x19xf32> to vector<12x18xf32>
    %29 = vector.extract_strided_slice %27 {offsets = [0, 18], sizes = [12, 1], strides = [1, 1]} : vector<12x19xf32> to vector<12x1xf32>
    %cst_14 = arith.constant dense<0.000000e+00> : vector<12x128xf32>
    %30 = tpu.matmul %28, %26, %cst_14 {dimension_numbers = #tpu.dot_dimension_numbers<[1], [0], [0], [1], [0, 0, 1, 1], [], []>} : vector<12x18xf32>, vector<18x128xf32>, vector<12x128xf32> -> vector<12x128xf32>
    %31 = vector.broadcast %29 : vector<12x1xf32> to vector<12x128xf32>
    %32 = arith.addf %30, %31 : vector<12x128xf32>
    %cst_15 = arith.constant 0.000000e+00 : f32
    %33 = vector.broadcast %cst_15 : f32 to vector<12x128xf32>
    %34 = arith.maximumf %32, %33 : vector<12x128xf32>
    %c0_16 = arith.constant 0 : index
    %c0_17 = arith.constant 0 : index
    %35 = vector.load %arg5[%c0_16, %c0_17] : memref<1x13xf32, #tpu.memory_space<vmem>>, vector<1x13xf32>
    %36 = vector.extract_strided_slice %35 {offsets = [0, 0], sizes = [1, 12], strides = [1, 1]} : vector<1x13xf32> to vector<1x12xf32>
    %37 = vector.extract_strided_slice %35 {offsets = [0, 12], sizes = [1, 1], strides = [1, 1]} : vector<1x13xf32> to vector<1x1xf32>
    %cst_18 = arith.constant dense<0.000000e+00> : vector<1x128xf32>
    %38 = tpu.matmul %36, %34, %cst_18 {dimension_numbers = #tpu.dot_dimension_numbers<[1], [0], [0], [1], [0, 0, 1, 1], [], []>} : vector<1x12xf32>, vector<12x128xf32>, vector<1x128xf32> -> vector<1x128xf32>
    %39 = vector.broadcast %37 : vector<1x1xf32> to vector<1x128xf32>
    %40 = arith.addf %38, %39 : vector<1x128xf32>
    %c0_19 = arith.constant 0 : index
    %c0_20 = arith.constant 0 : index
    %41 = vector.load %arg6[%c0_19, %c0_20] : memref<1x128xf32, #tpu.memory_space<vmem>>, vector<1x128xf32>
    tpu.vector_store %arg6[%c0_19, %c0_20], %40 {strides = array<i32>} : memref<1x128xf32, #tpu.memory_space<vmem>>, vector<1x128xf32>,
    return
  }
  func.func @transform_0(%arg0: i32) -> (i32, i32) {
    %c0_i32 = arith.constant 0 : i32
    %c0_i32_0 = arith.constant 0 : i32
    return %c0_i32, %arg0 : i32, i32
  }
  func.func @transform_1(%arg0: i32) -> (i32, i32) {
    %c0_i32 = arith.constant 0 : i32
    %c0_i32_0 = arith.constant 0 : i32
    %c0_i32_1 = arith.constant 0 : i32
    return %c0_i32, %c0_i32_0 : i32, i32
  }
  func.func @transform_2(%arg0: i32) -> (i32, i32) {
    %c0_i32 = arith.constant 0 : i32
    %c0_i32_0 = arith.constant 0 : i32
    %c0_i32_1 = arith.constant 0 : i32
    return %c0_i32, %c0_i32_0 : i32, i32
  }
  func.func @transform_3(%arg0: i32) -> (i32, i32) {
    %c0_i32 = arith.constant 0 : i32
    %c0_i32_0 = arith.constant 0 : i32
    %c0_i32_1 = arith.constant 0 : i32
    return %c0_i32, %c0_i32_0 : i32, i32
  }
  func.func @transform_4(%arg0: i32) -> (i32, i32) {
    %c0_i32 = arith.constant 0 : i32
    %c0_i32_0 = arith.constant 0 : i32
    %c0_i32_1 = arith.constant 0 : i32
    return %c0_i32, %c0_i32_0 : i32, i32
  }
  func.func @transform_5(%arg0: i32) -> (i32, i32) {
    %c0_i32 = arith.constant 0 : i32
    %c0_i32_0 = arith.constant 0 : i32
    return %c0_i32, %arg0 : i32, i32
  }
}

</mosaic_0001>

<llo_original>
// kernel: mlp_forward.1
$region0: #{mlp_forward.1}
  #allocation0 [shape = 'u32[]', space=smem, size = 0x4, offset = 0x4, fixed_abs, tag = 'smem constant byte address 0x4 - core index']
  #allocation1 [shape = 'u32[144,128]{1,0:T(1,128)}', space=vmem, size = 0x12000, scoped, tag = 'internal scratch']
  %s0 = inlined_call_operand.vmem [shape: f32[6,128], index: 0, kind: input, shape index: {}]
  %s1 = inlined_call_operand.vmem [shape: f32[24,7], index: 1, kind: input, shape index: {}]
  %s2 = inlined_call_operand.vmem [shape: f32[18,25], index: 2, kind: input, shape index: {}]
  %s3 = inlined_call_operand.vmem [shape: f32[12,19], index: 3, kind: input, shape index: {}]
  %s4 = inlined_call_operand.vmem [shape: f32[1,13], index: 4, kind: input, shape index: {}]
  %s5 = inlined_call_operand.vmem [shape: f32[1,128], index: 5, kind: output, shape index: {}]
  %s6 = sld [smem:[#allocation0]]
  $region30: #{mlp_forward.1} parent=0
    _
  %s8 = ssub.s32 1, %s6
  %s9 = scalar_select 0, %s8, %s6
  // Predicated region
  $region2: #{mlp_forward.1} parent=0 // pred_check
    _
  $region3: #{mlp_forward.1} parent=0 // pred_check_branch
    %11 = sbr.rel (0) target = $region5
  $region4: #{mlp_forward.1} parent=0 // pred_region
    _
  $region5: #{mlp_forward.1} parent=0 // pred_fallthru
    _
  // Predicated region
  $region6: #{mlp_forward.1} parent=0 // pred_check
    _
  $region7: #{mlp_forward.1} parent=0 // pred_check_branch
    %13 = sbr.rel (0) target = $region9
  $region8: #{mlp_forward.1} parent=0 // pred_region
    _
  $region9: #{mlp_forward.1} parent=0 // pred_fallthru
    _
  // Predicated region
  $region10: #{mlp_forward.1} parent=0 // pred_check
    _
  $region11: #{mlp_forward.1} parent=0 // pred_check_branch
    %15 = sbr.rel (0) target = $region13
  $region12: #{mlp_forward.1} parent=0 // pred_region
    _
  $region13: #{mlp_forward.1} parent=0 // pred_fallthru
    _
  // Predicated region
  $region14: #{mlp_forward.1} parent=0 // pred_check
    _
  $region15: #{mlp_forward.1} parent=0 // pred_check_branch
    %17 = sbr.rel (0) target = $region17
  $region16: #{mlp_forward.1} parent=0 // pred_region
    _
  $region17: #{mlp_forward.1} parent=0 // pred_fallthru
    _
  // Predicated region
  $region18: #{mlp_forward.1} parent=0 // pred_check
    _
  $region19: #{mlp_forward.1} parent=0 // pred_check_branch
    %19 = sbr.rel (0) target = $region21
  $region20: #{mlp_forward.1} parent=0 // pred_region
    _
  $region21: #{mlp_forward.1} parent=0 // pred_fallthru
    _
  %v20 = vld [vmem:[%s0] sm:$0x3f]
  %v21 = vld [vmem:[%s1] sm:$0xff]
  %v22 = vld [vmem:[%s1 + $0x8] sm:$0xff]
  %v23 = vld [vmem:[%s1 + $0x10] sm:$0xff]
  %25 = vset.pattern.permute.xlu0 6
  %26 = vperm.xlu0 %25, %v21
  %v27 = vpop.permute.xlu0 %26
  %30 = vset.pattern.permute.xlu0 6
  %31 = vperm.xlu0 %30, %v22
  %v32 = vpop.permute.xlu0 %31
  %35 = vset.pattern.permute.xlu0 6
  %36 = vperm.xlu0 %35, %v23
  %v37 = vpop.permute.xlu0 %36
  %vm39 = vcmask 48128
  %v40 = vsel %vm39, %v21, 0
  %v42 = vsel %vm39, %v22, 0
  %v44 = vsel %vm39, %v23, 0
  %vm46 = vcmask 1045504
  %v48 = vsel %vm46, %v20, 0
  %50 = vmatprep.subr.mxu0 0.0
  %51 = vmatpush1.msra.mxu0 %v48
  %52 = vmatprep.subr.mxu0 0.0
  %53 = vmatpush1.msra.mxu0 0.0
  %54 = vmatprep.subr.mxu0 0.0
  %55 = vmatpush1.msra.mxu0 0.0
  %56 = vmatprep.subr.mxu0 0.0
  %57 = vmatpush1.msra.mxu0 0.0
  %58 = vmatprep.subr.mxu0 0.0
  %59 = vmatpush1.msra.mxu0 0.0
  %60 = vmatprep.subr.mxu0 0.0
  %61 = vmatpush1.msra.mxu0 0.0
  %62 = vmatprep.subr.mxu0 0.0
  %63 = vmatpush1.msra.mxu0 0.0
  %64 = vmatprep.subr.mxu0 0.0
  %65 = vmatpush1.msra.mxu0 0.0
  %66 = vmatprep.subr.mxu0 0.0
  %67 = vmatpush1.msra.mxu0 0.0
  %68 = vmatprep.subr.mxu0 0.0
  %69 = vmatpush1.msra.mxu0 0.0
  %70 = vmatprep.subr.mxu0 0.0
  %71 = vmatpush1.msra.mxu0 0.0
  %72 = vmatprep.subr.mxu0 0.0
  %73 = vmatpush1.msra.mxu0 0.0
  %74 = vmatprep.subr.mxu0 0.0
  %75 = vmatpush1.msra.mxu0 0.0
  %76 = vmatprep.subr.mxu0 0.0
  %77 = vmatpush1.msra.mxu0 0.0
  %78 = vmatprep.subr.mxu0 0.0
  %79 = vmatpush1.msra.mxu0 0.0
  %80 = vmatprep.subr.mxu0 0.0
  %81 = vmatpush1.msra.mxu0 0.0
  %82 = vmatprep.subr.mxu0 0.0
  %83 = vmatpush1.msra.mxu0 0.0
  %84 = vmatprep.subr.mxu0 0.0
  %85 = vmatpush1.msra.mxu0 0.0
  %86 = vmatprep.subr.mxu0 0.0
  %87 = vmatpush1.msra.mxu0 0.0
  %88 = vmatprep.subr.mxu0 0.0
  %89 = vmatpush1.msra.mxu0 0.0
  %90 = vmatprep.subr.mxu0 0.0
  %91 = vmatpush1.msra.mxu0 0.0
  %92 = vmatprep.subr.mxu0 0.0
  %93 = vmatpush1.msra.mxu0 0.0
  %94 = vmatprep.subr.mxu0 0.0
  %95 = vmatpush1.msra.mxu0 0.0
  %96 = vmatprep.subr.mxu0 0.0
  %97 = vmatpush1.msra.mxu0 0.0
  %98 = vmatprep.subr.mxu0 0.0
  %99 = vmatpush1.msra.mxu0 0.0
  %100 = vmatprep.subr.mxu0 0.0
  %101 = vmatpush1.msra.mxu0 0.0
  %102 = vmatprep.subr.mxu0 0.0
  %103 = vmatpush1.msra.mxu0 0.0
  %104 = vmatprep.subr.mxu0 0.0
  %105 = vmatpush1.msra.mxu0 0.0
  %106 = vmatprep.subr.mxu0 0.0
  %107 = vmatpush1.msra.mxu0 0.0
  %108 = vmatprep.subr.mxu0 0.0
  %109 = vmatpush1.msra.mxu0 0.0
  %110 = vmatprep.subr.mxu0 0.0
  %111 = vmatpush1.msra.mxu0 0.0
  %112 = vmatprep.subr.mxu0 0.0
  %113 = vmatpush1.msra.mxu0 0.0
  %114 = vmatprep.mubr.f32.mxu0 0.0
  %115 = vmatmul.mubr.f32.gmra.mrb[0].mxu0 %v40
  %v116 = vpop.f32.mrb[0].mxu0
  %v117 = vadd.f32 %v27, %v116
  %v118 = vpop.f32.mrb[0].mxu0
  %119 = vmatprep.mubr.f32.mxu0 0.0
  %120 = vmatmul.mubr.f32.gmra.mrb[0].mxu0 %v42
  %v121 = vpop.f32.mrb[0].mxu0
  %v122 = vadd.f32 %v32, %v121
  %v123 = vpop.f32.mrb[0].mxu0
  %124 = vmatprep.mubr.f32.mxu0 0.0
  %125 = vmatmul.mubr.f32.gmra.mrb[0].mxu0 %v44
  %v126 = vpop.f32.mrb[0].mxu0
  %v127 = vadd.f32 %v37, %v126
  %v128 = vpop.f32.mrb[0].mxu0
  %129 = vdwg.mxu0
  %v130 = vmul.f32 %v117, 0.5
  %v131 = vmul.f32 %v122, 0.5
  %v132 = vmul.f32 %v127, 0.5
  %v133 = vtanh.pop %v130
  %v134 = vtanh.pop %v131
  %v135 = vtanh.pop %v132
  %v136 = vmul.f32 %v133, 0.5
  %v137 = vmul.f32 %v134, 0.5
  %v138 = vmul.f32 %v135, 0.5
  %v139 = vadd.f32 %v136, 0.5
  %v140 = vadd.f32 %v137, 0.5
  %v141 = vadd.f32 %v138, 0.5
  %v142 = vld [vmem:[%s2] sm:$0xff]
  %v143 = vld [vmem:[%s2 + $0x8] sm:$0xff]
  %v144 = vld [vmem:[%s2 + $0x10] sm:$0x3]
  %146 = vset.pattern.permute.xlu0 24
  %147 = vperm.xlu0 %146, %v142
  %v148 = vpop.permute.xlu0 %147
  %151 = vset.pattern.permute.xlu0 24
  %152 = vperm.xlu0 %151, %v143
  %v153 = vpop.permute.xlu0 %152
  %156 = vset.pattern.permute.xlu0 24
  %157 = vperm.xlu0 %156, %v144
  %v158 = vpop.permute.xlu0 %157
  %vm160 = vcmask 195584
  %v161 = vsel %vm160, %v142, 0
  %v163 = vsel %vm160, %v143, 0
  %v165 = vsel %vm160, %v144, 0
  %167 = vmatprep.subr.mxu0 0.0
  %168 = vmatpush1.msra.mxu0 %v139
  %169 = vmatprep.subr.mxu0 0.0
  %170 = vmatpush1.msra.mxu0 %v140
  %171 = vmatprep.subr.mxu0 0.0
  %172 = vmatpush1.msra.mxu0 %v141
  %173 = vmatprep.subr.mxu0 0.0
  %174 = vmatpush1.msra.mxu0 0.0
  %175 = vmatprep.subr.mxu0 0.0
  %176 = vmatpush1.msra.mxu0 0.0
  %177 = vmatprep.subr.mxu0 0.0
  %178 = vmatpush1.msra.mxu0 0.0
  %179 = vmatprep.subr.mxu0 0.0
  %180 = vmatpush1.msra.mxu0 0.0
  %181 = vmatprep.subr.mxu0 0.0
  %182 = vmatpush1.msra.mxu0 0.0
  %183 = vmatprep.subr.mxu0 0.0
  %184 = vmatpush1.msra.mxu0 0.0
  %185 = vmatprep.subr.mxu0 0.0
  %186 = vmatpush1.msra.mxu0 0.0
  %187 = vmatprep.subr.mxu0 0.0
  %188 = vmatpush1.msra.mxu0 0.0
  %189 = vmatprep.subr.mxu0 0.0
  %190 = vmatpush1.msra.mxu0 0.0
  %191 = vmatprep.subr.mxu0 0.0
  %192 = vmatpush1.msra.mxu0 0.0
  %193 = vmatprep.subr.mxu0 0.0
  %194 = vmatpush1.msra.mxu0 0.0
  %195 = vmatprep.subr.mxu0 0.0
  %196 = vmatpush1.msra.mxu0 0.0
  %197 = vmatprep.subr.mxu0 0.0
  %198 = vmatpush1.msra.mxu0 0.0
  %199 = vmatprep.subr.mxu0 0.0
  %200 = vmatpush1.msra.mxu0 0.0
  %201 = vmatprep.subr.mxu0 0.0
  %202 = vmatpush1.msra.mxu0 0.0
  %203 = vmatprep.subr.mxu0 0.0
  %204 = vmatpush1.msra.mxu0 0.0
  %205 = vmatprep.subr.mxu0 0.0
  %206 = vmatpush1.msra.mxu0 0.0
  %207 = vmatprep.subr.mxu0 0.0
  %208 = vmatpush1.msra.mxu0 0.0
  %209 = vmatprep.subr.mxu0 0.0
  %210 = vmatpush1.msra.mxu0 0.0
  %211 = vmatprep.subr.mxu0 0.0
  %212 = vmatpush1.msra.mxu0 0.0
  %213 = vmatprep.subr.mxu0 0.0
  %214 = vmatpush1.msra.mxu0 0.0
  %215 = vmatprep.subr.mxu0 0.0
  %216 = vmatpush1.msra.mxu0 0.0
  %217 = vmatprep.subr.mxu0 0.0
  %218 = vmatpush1.msra.mxu0 0.0
  %219 = vmatprep.subr.mxu0 0.0
  %220 = vmatpush1.msra.mxu0 0.0
  %221 = vmatprep.subr.mxu0 0.0
  %222 = vmatpush1.msra.mxu0 0.0
  %223 = vmatprep.subr.mxu0 0.0
  %224 = vmatpush1.msra.mxu0 0.0
  %225 = vmatprep.subr.mxu0 0.0
  %226 = vmatpush1.msra.mxu0 0.0
  %227 = vmatprep.subr.mxu0 0.0
  %228 = vmatpush1.msra.mxu0 0.0
  %229 = vmatprep.subr.mxu0 0.0
  %230 = vmatpush1.msra.mxu0 0.0
  %231 = vmatprep.mubr.f32.mxu0 0.0
  %232 = vmatmul.mubr.f32.gmra.mrb[0].mxu0 %v161
  %v233 = vpop.f32.mrb[0].mxu0
  %v234 = vadd.f32 %v148, %v233
  %v235 = vpop.f32.mrb[0].mxu0
  %236 = vmatprep.mubr.f32.mxu0 0.0
  %237 = vmatmul.mubr.f32.gmra.mrb[0].mxu0 %v163
  %v238 = vpop.f32.mrb[0].mxu0
  %v239 = vadd.f32 %v153, %v238
  %v240 = vpop.f32.mrb[0].mxu0
  %241 = vmatprep.mubr.f32.mxu0 0.0
  %242 = vmatmul.mubr.f32.gmra.mrb[0].mxu0 %v165
  %v243 = vpop.f32.mrb[0].mxu0
  %v244 = vadd.f32 %v158, %v243
  %v245 = vpop.f32.mrb[0].mxu0
  %246 = vdwg.mxu0
  %v247 = vmul.f32 %v234, 0.5
  %v248 = vmul.f32 %v239, 0.5
  %v249 = vmul.f32 %v244, 0.5
  %v250 = vtanh.pop %v247
  %v251 = vtanh.pop %v248
  %v252 = vtanh.pop %v249
  %v253 = vmul.f32 %v250, 0.5
  %v254 = vmul.f32 %v251, 0.5
  %v255 = vmul.f32 %v252, 0.5
  %v256 = vadd.f32 %v253, 0.5
  %v257 = vadd.f32 %v254, 0.5
  %v258 = vadd.f32 %v255, 0.5
  %v259 = vld [vmem:[%s3] sm:$0xff]
  %v260 = vld [vmem:[%s3 + $0x8] sm:$0xf]
  %262 = vset.pattern.permute.xlu0 18
  %263 = vperm.xlu0 %262, %v259
  %v264 = vpop.permute.xlu0 %263
  %267 = vset.pattern.permute.xlu0 18
  %268 = vperm.xlu0 %267, %v260
  %v269 = vpop.permute.xlu0 %268
  %vm271 = vcmask 146432
  %v272 = vsel %vm271, %v259, 0
  %v274 = vsel %vm271, %v260, 0
  %vm276 = vcmask 1041408
  %v278 = vsel %vm276, %v258, 0
  %280 = vmatprep.subr.mxu0 0.0
  %281 = vmatpush1.msra.mxu0 %v256
  %282 = vmatprep.subr.mxu0 0.0
  %283 = vmatpush1.msra.mxu0 %v257
  %284 = vmatprep.subr.mxu0 0.0
  %285 = vmatpush1.msra.mxu0 %v278
  %286 = vmatprep.subr.mxu0 0.0
  %287 = vmatpush1.msra.mxu0 0.0
  %288 = vmatprep.subr.mxu0 0.0
  %289 = vmatpush1.msra.mxu0 0.0
  %290 = vmatprep.subr.mxu0 0.0
  %291 = vmatpush1.msra.mxu0 0.0
  %292 = vmatprep.subr.mxu0 0.0
  %293 = vmatpush1.msra.mxu0 0.0
  %294 = vmatprep.subr.mxu0 0.0
  %295 = vmatpush1.msra.mxu0 0.0
  %296 = vmatprep.subr.mxu0 0.0
  %297 = vmatpush1.msra.mxu0 0.0
  %298 = vmatprep.subr.mxu0 0.0
  %299 = vmatpush1.msra.mxu0 0.0
  %300 = vmatprep.subr.mxu0 0.0
  %301 = vmatpush1.msra.mxu0 0.0
  %302 = vmatprep.subr.mxu0 0.0
  %303 = vmatpush1.msra.mxu0 0.0
  %304 = vmatprep.subr.mxu0 0.0
  %305 = vmatpush1.msra.mxu0 0.0
  %306 = vmatprep.subr.mxu0 0.0
  %307 = vmatpush1.msra.mxu0 0.0
  %308 = vmatprep.subr.mxu0 0.0
  %309 = vmatpush1.msra.mxu0 0.0
  %310 = vmatprep.subr.mxu0 0.0
  %311 = vmatpush1.msra.mxu0 0.0
  %312 = vmatprep.subr.mxu0 0.0
  %313 = vmatpush1.msra.mxu0 0.0
  %314 = vmatprep.subr.mxu0 0.0
  %315 = vmatpush1.msra.mxu0 0.0
  %316 = vmatprep.subr.mxu0 0.0
  %317 = vmatpush1.msra.mxu0 0.0
  %318 = vmatprep.subr.mxu0 0.0
  %319 = vmatpush1.msra.mxu0 0.0
  %320 = vmatprep.subr.mxu0 0.0
  %321 = vmatpush1.msra.mxu0 0.0
  %322 = vmatprep.subr.mxu0 0.0
  %323 = vmatpush1.msra.mxu0 0.0
  %324 = vmatprep.subr.mxu0 0.0
  %325 = vmatpush1.msra.mxu0 0.0
  %326 = vmatprep.subr.mxu0 0.0
  %327 = vmatpush1.msra.mxu0 0.0
  %328 = vmatprep.subr.mxu0 0.0
  %329 = vmatpush1.msra.mxu0 0.0
  %330 = vmatprep.subr.mxu0 0.0
  %331 = vmatpush1.msra.mxu0 0.0
  %332 = vmatprep.subr.mxu0 0.0
  %333 = vmatpush1.msra.mxu0 0.0
  %334 = vmatprep.subr.mxu0 0.0
  %335 = vmatpush1.msra.mxu0 0.0
  %336 = vmatprep.subr.mxu0 0.0
  %337 = vmatpush1.msra.mxu0 0.0
  %338 = vmatprep.subr.mxu0 0.0
  %339 = vmatpush1.msra.mxu0 0.0
  %340 = vmatprep.subr.mxu0 0.0
  %341 = vmatpush1.msra.mxu0 0.0
  %342 = vmatprep.subr.mxu0 0.0
  %343 = vmatpush1.msra.mxu0 0.0
  %344 = vmatprep.mubr.f32.mxu0 0.0
  %345 = vmatmul.mubr.f32.gmra.mrb[0].mxu0 %v272
  %v346 = vpop.f32.mrb[0].mxu0
  %v347 = vadd.f32 %v264, %v346
  %v348 = vpop.f32.mrb[0].mxu0
  %349 = vmatprep.mubr.f32.mxu0 0.0
  %350 = vmatmul.mubr.f32.gmra.mrb[0].mxu0 %v274
  %v351 = vpop.f32.mrb[0].mxu0
  %v352 = vadd.f32 %v269, %v351
  %v353 = vpop.f32.mrb[0].mxu0
  %354 = vdwg.mxu0
  %v355 = vmax.f32 %v347, 0.0
  %v356 = vmax.f32 %v352, 0.0
  %v357 = vld [vmem:[%s4] sm:$0x1]
  %359 = vset.pattern.permute.xlu0 12
  %360 = vperm.xlu0 %359, %v357
  %v361 = vpop.permute.xlu0 %360
  %v363 = vlaneseq
  %v364 = vshrl.u32 %v363, 7
  %v365 = vsub.s32 0, %v364
  %v366 = vrot.slane %v361, %v365
  %vm367 = vcmask 97280
  %v368 = vsel %vm367, %v357, 0
  %vm370 = vcmask 1043456
  %v372 = vsel %vm370, %v356, 0
  %374 = vmatprep.subr.mxu0 0.0
  %375 = vmatpush1.msra.mxu0 %v355
  %376 = vmatprep.subr.mxu0 0.0
  %377 = vmatpush1.msra.mxu0 %v372
  %378 = vmatprep.subr.mxu0 0.0
  %379 = vmatpush1.msra.mxu0 0.0
  %380 = vmatprep.subr.mxu0 0.0
  %381 = vmatpush1.msra.mxu0 0.0
  %382 = vmatprep.subr.mxu0 0.0
  %383 = vmatpush1.msra.mxu0 0.0
  %384 = vmatprep.subr.mxu0 0.0
  %385 = vmatpush1.msra.mxu0 0.0
  %386 = vmatprep.subr.mxu0 0.0
  %387 = vmatpush1.msra.mxu0 0.0
  %388 = vmatprep.subr.mxu0 0.0
  %389 = vmatpush1.msra.mxu0 0.0
  %390 = vmatprep.subr.mxu0 0.0
  %391 = vmatpush1.msra.mxu0 0.0
  %392 = vmatprep.subr.mxu0 0.0
  %393 = vmatpush1.msra.mxu0 0.0
  %394 = vmatprep.subr.mxu0 0.0
  %395 = vmatpush1.msra.mxu0 0.0
  %396 = vmatprep.subr.mxu0 0.0
  %397 = vmatpush1.msra.mxu0 0.0
  %398 = vmatprep.subr.mxu0 0.0
  %399 = vmatpush1.msra.mxu0 0.0
  %400 = vmatprep.subr.mxu0 0.0
  %401 = vmatpush1.msra.mxu0 0.0
  %402 = vmatprep.subr.mxu0 0.0
  %403 = vmatpush1.msra.mxu0 0.0
  %404 = vmatprep.subr.mxu0 0.0
  %405 = vmatpush1.msra.mxu0 0.0
  %406 = vmatprep.subr.mxu0 0.0
  %407 = vmatpush1.msra.mxu0 0.0
  %408 = vmatprep.subr.mxu0 0.0
  %409 = vmatpush1.msra.mxu0 0.0
  %410 = vmatprep.subr.mxu0 0.0
  %411 = vmatpush1.msra.mxu0 0.0
  %412 = vmatprep.subr.mxu0 0.0
  %413 = vmatpush1.msra.mxu0 0.0
  %414 = vmatprep.subr.mxu0 0.0
  %415 = vmatpush1.msra.mxu0 0.0
  %416 = vmatprep.subr.mxu0 0.0
  %417 = vmatpush1.msra.mxu0 0.0
  %418 = vmatprep.subr.mxu0 0.0
  %419 = vmatpush1.msra.mxu0 0.0
  %420 = vmatprep.subr.mxu0 0.0
  %421 = vmatpush1.msra.mxu0 0.0
  %422 = vmatprep.subr.mxu0 0.0
  %423 = vmatpush1.msra.mxu0 0.0
  %424 = vmatprep.subr.mxu0 0.0
  %425 = vmatpush1.msra.mxu0 0.0
  %426 = vmatprep.subr.mxu0 0.0
  %427 = vmatpush1.msra.mxu0 0.0
  %428 = vmatprep.subr.mxu0 0.0
  %429 = vmatpush1.msra.mxu0 0.0
  %430 = vmatprep.subr.mxu0 0.0
  %431 = vmatpush1.msra.mxu0 0.0
  %432 = vmatprep.subr.mxu0 0.0
  %433 = vmatpush1.msra.mxu0 0.0
  %434 = vmatprep.subr.mxu0 0.0
  %435 = vmatpush1.msra.mxu0 0.0
  %436 = vmatprep.subr.mxu0 0.0
  %437 = vmatpush1.msra.mxu0 0.0
  %438 = vmatprep.mubr.f32.mxu0 0.0
  %439 = vmatmul.mubr.f32.gmra.mrb[0].mxu0 %v368
  %v440 = vpop.f32.mrb[0].mxu0
  %v441 = vadd.f32 %v366, %v440
  %v442 = vpop.f32.mrb[0].mxu0
  %443 = vdwg.mxu0
  %444 = vst [vmem:[%s5] sm:$0x1] %v441
  // Predicated region
  $region22: #{mlp_forward.1} parent=0 // pred_check
    _
  $region23: #{mlp_forward.1} parent=0 // pred_check_branch
    %446 = sbr.rel (0) target = $region25
  $region24: #{mlp_forward.1} parent=0 // pred_region
    _
  $region25: #{mlp_forward.1} parent=0 // pred_fallthru
    _
  // Predicated region
  $region26: #{mlp_forward.1} parent=0 // pred_check
    _
  $region27: #{mlp_forward.1} parent=0 // pred_check_branch
    %448 = sbr.rel (0) target = $region29
  $region28: #{mlp_forward.1} parent=0 // pred_region
    _
  $region29: #{mlp_forward.1} parent=0 // pred_fallthru
    _

</llo_original>
